<compile_context>
chip_gen: v7x
topology: tpu7x:2x2x1
jax: 0.10.0
libtpu: 0.0.40
codegen_flags: <defaults>
</compile_context>

<pallas_src>
import jax
import jax.numpy as jnp
from jax.experimental import pallas as pl
from jax.experimental.pallas import tpu as pltpu


def _round_up(x, m):
    return ((x + m - 1) // m) * m


def _make_kernel(rows_total, block_rows, sub_rows, s_steps, lanes):
    n_sub = block_rows // sub_rows

    def kernel(probs_ref, dist_ref, acc_ref):
        p_idx = pl.program_id(0)
        s_idx = pl.program_id(1)

        @pl.when(s_idx == 0)
        def _init():
            acc_ref[...] = jnp.zeros_like(acc_ref)

        # Unclamped logical block index -> number of valid rows in this block.
        # valid <= 0 for "excess" grid steps (row_blocks not divisible by
        # p_chunks); 0 < valid < block_rows for the ragged last block.  The
        # implicit padding of a partial block is unspecified data and MUST be
        # masked, which the iota mask below does.
        bi = p_idx * s_steps + s_idx
        valid = rows_total - bi * block_rows

        @pl.loop(0, n_sub)
        def _(g):
            r = pl.multiple_of(g * sub_rows, sub_rows)
            p = probs_ref[pl.ds(r, sub_rows), :].astype(jnp.float32)
            d = dist_ref[pl.ds(r, sub_rows), :].astype(jnp.float32)
            # single-transcendental sigmoid (EUP-friendly): 0.5*(tanh(x/2)+1)
            sig = 0.5 * (jnp.tanh(0.5 * p) + 1.0)
            row_ids = jax.lax.broadcasted_iota(jnp.int32, (sub_rows, lanes), 0) + r
            keep = row_ids < valid
            acc_ref[...] += jnp.where(keep, sig * d, 0.0)

    return kernel


def surface_loss(probs, dist_maps, mask=1.0, sample_weight=1.0):
    """Pallas implementation of SurfaceLoss(idc=None, reduction='mean',
    normalization='sigmoid').forward(probs, dist_maps, mask, sample_weight).

    probs, dist_maps: (B, K, H, W) or (B, K, X, Y, Z); spatial dims flattened.
    mask / sample_weight must be scalars (module default).
    bf16 inputs are supported and halve HBM read traffic (upcast in-kernel).
    """
    assert probs.shape == dist_maps.shape
    assert jnp.ndim(mask) == 0 and jnp.ndim(sample_weight) == 0, \
        "only scalar mask / sample_weight are supported (module defaults)"
    # TODO(synk): tensor-valued mask / per-sample sample_weight, idc channel
    # selection, softmax normalization and reduction != 'mean' not implemented
    # (the global-sum collapse used here needs the scalar defaults).

    b = probs.shape[0]
    n = 1
    for s in probs.shape:
        n *= s
    d_per_sample = n // b

    # ---- 2-D view: free contiguous reshape, NO pad, NO copy -----------------
    if n % 128 == 0:
        lanes = 128                        # dense lane utilisation
    else:
        lanes = probs.shape[-1]            # full last dim (legal full-dim block)
    rows_total = n // lanes
    lanes_pad = _round_up(lanes, 128)      # VMEM lane footprint per row

    probs2 = probs.reshape(rows_total, lanes)
    dist2 = dist_maps.reshape(rows_total, lanes)

    # ---- block sizing: target ~4 MiB VMEM / input / pipeline buffer ---------
    # (8 MiB on 128-MiB-VMEM parts: v5e/v6e; keep 4 MiB on 64-MiB v7x.)
    target_block_bytes = 4 * 1024 * 1024
    try:
        if pltpu.get_tpu_info().vmem_capacity_bytes > 64 * 1024 * 1024:
            target_block_bytes = 8 * 1024 * 1024
    except Exception:
        pass
    itemsize = max(probs.dtype.itemsize, dist_maps.dtype.itemsize)
    rows_for_target = max(8, (target_block_bytes // (lanes_pad * itemsize)) // 8 * 8)
    block_rows = min(rows_for_target, _round_up(rows_total, 8))
    if block_rows > 512:
        block_rows = (block_rows // 512) * 512   # multiple of the sub-tile size
        sub_rows = 512                           # bounds in-kernel f32 temporaries
    else:
        sub_rows = block_rows                    # multiple of 8

    row_blocks = pl.cdiv(rows_total, block_rows)
    # Split across chunks (TensorCores on megacore parts); prefer exact splits
    # so no grid step is wasted re-reading (and masking) the last block.
    if row_blocks % 8 == 0:
        p_chunks = 8
    elif row_blocks % 4 == 0:
        p_chunks = 4
    elif row_blocks >= 2:
        p_chunks = 2
    else:
        p_chunks = 1
    s_steps = pl.cdiv(row_blocks, p_chunks)

    if p_chunks * s_steps == row_blocks:
        in_map = lambda p, s: (p * s_steps + s, 0)
    else:
        # Excess steps clamp to the last real block (their contribution is
        # masked to zero in-kernel); at most p_chunks-1 duplicated block reads.
        in_map = lambda p, s: (jnp.minimum(p * s_steps + s, row_blocks - 1), 0)

    kernel = _make_kernel(rows_total, block_rows, sub_rows, s_steps, lanes)

    partials = pl.pallas_call(
        kernel,
        out_shape=jax.ShapeDtypeStruct((p_chunks * sub_rows, lanes), jnp.float32),
        grid_spec=pltpu.PrefetchScalarGridSpec(
            num_scalar_prefetch=0,
            grid=(p_chunks, s_steps),              # reduction axis last
            in_specs=[
                pl.BlockSpec((block_rows, lanes), in_map),
                pl.BlockSpec((block_rows, lanes), in_map),
            ],
            out_specs=pl.BlockSpec((sub_rows, lanes), lambda p, s: (p, 0)),
        ),
        compiler_params=pltpu.CompilerParams(
            # NOTE: verify in a profile that the "parallel" axis shards across
            # both TensorCores on v7x; switch to pltpu.CORE_PARALLEL if not.
            dimension_semantics=("parallel", "arbitrary"),
            vmem_limit_bytes=48 * 1024 * 1024,     # fits v5e/v6e/v7x
        ),
        cost_estimate=pl.CostEstimate(
            flops=8 * n,
            transcendentals=n,
            bytes_accessed=n * (probs.dtype.itemsize + dist_maps.dtype.itemsize)
            + p_chunks * sub_rows * lanes * 4,
        ),
    )(probs2, dist2)

    # one fused scalar: mask^2 * sample_weight / (B * D_per_sample)
    scale = (mask * mask) * sample_weight / float(b * d_per_sample)
    return jnp.sum(partials, dtype=jnp.float32) * scale


def _surface_loss_ref(probs, dist_maps, mask=1.0, sample_weight=1.0):
    # pure-JAX reference mirroring the PyTorch forward
    p = jax.nn.sigmoid(probs.astype(jnp.float32))
    pc = p * mask
    dc = dist_maps.astype(jnp.float32) * mask
    multipled = pc * dc
    loss = jnp.mean(multipled, axis=tuple(range(1, multipled.ndim)))
    loss = loss * sample_weight
    return jnp.mean(loss)


if __name__ == "__main__":
    key = jax.random.PRNGKey(0)
    k1, k2 = jax.random.split(key)
    B, K, H, W = 2, 4, 16, 16
    probs = jax.random.normal(k1, (B, K, H, W), dtype=jnp.float32)      # logits
    dist_maps = jax.random.normal(k2, (B, K, H, W), dtype=jnp.float32)  # signed dist maps

    out = surface_loss(probs, dist_maps, mask=1.0, sample_weight=1.0)
    out = jax.block_until_ready(out)

    ref = _surface_loss_ref(probs, dist_maps)
    assert jnp.allclose(out, ref, atol=1e-5, rtol=1e-5), (out, ref)
    print("KERNEL_OK")
</pallas_src>

<mosaic_0001>
module attributes {stable_mosaic.version = 11 : i64} {
  func.func @kernel(%arg0: i32, %arg1: i32, %arg2: memref<16x128xf32, #tpu.memory_space<vmem>>, %arg3: memref<16x128xf32, #tpu.memory_space<vmem>>, %arg4: memref<16x128xf32, #tpu.memory_space<vmem>>) attributes {dimension_semantics = [#tpu.dimension_semantics<parallel>, #tpu.dimension_semantics<arbitrary>], iteration_bounds = array<i64: 1, 1>, scalar_prefetch = 0 : i64, scratch_operands = 0 : i64, tpu.core_type = #tpu.core_type<tc>, window_params = [{transform_indices = @transform_0, window_bounds = array<i64: 16, 128>}, {transform_indices = @transform_1, window_bounds = array<i64: 16, 128>}, {transform_indices = @transform_2, window_bounds = array<i64: 16, 128>}]} {
    %c0_i32 = arith.constant 0 : i32
    %0 = arith.cmpi eq, %arg1, %c0_i32 : i32
    %1 = arith.extui %0 : i1 to i32
    %c0_i32_0 = arith.constant 0 : i32
    %2 = arith.cmpi ne, %1, %c0_i32_0 : i32
    scf.if %2 {
      %cst_15 = arith.constant 0.000000e+00 : f32
      %33 = vector.broadcast %cst_15 : f32 to vector<16x128xf32>
      %c0_16 = arith.constant 0 : index
      %c0_17 = arith.constant 0 : index
      %34 = vector.load %arg4[%c0_16, %c0_17] : memref<16x128xf32, #tpu.memory_space<vmem>>, vector<16x128xf32>
      tpu.vector_store %arg4[%c0_16, %c0_17], %33 {strides = array<i32>} : memref<16x128xf32, #tpu.memory_space<vmem>>, vector<16x128xf32>,
    } else {
    }
    %c1_i32 = arith.constant 1 : i32
    %3 = arith.muli %arg0, %c1_i32 : i32
    %4 = arith.addi %3, %arg1 : i32
    %c16_i32 = arith.constant 16 : i32
    %5 = arith.muli %4, %c16_i32 : i32
    %c16_i32_1 = arith.constant 16 : i32
    %6 = arith.subi %c16_i32_1, %5 : i32
    %c0_i32_2 = arith.constant 0 : i32
    %c1_i32_3 = arith.constant 1 : i32
    %7 = arith.muli %c0_i32_2, %c1_i32_3 : i32
    %c0_i32_4 = arith.constant 0 : i32
    %8 = arith.addi %c0_i32_4, %7 : i32
    %c16_i32_5 = arith.constant 16 : i32
    %9 = arith.muli %8, %c16_i32_5 : i32
    %10 = tpu.assume_multiple %9, 16 : i32
    %11 = arith.index_cast %10 : i32 to index
    %c0 = arith.constant 0 : index
    %12 = vector.load %arg2[%11, %c0] : memref<16x128xf32, #tpu.memory_space<vmem>>, vector<16x128xf32>
    %13 = arith.index_cast %10 : i32 to index
    %c0_6 = arith.constant 0 : index
    %14 = vector.load %arg3[%13, %c0_6] : memref<16x128xf32, #tpu.memory_space<vmem>>, vector<16x128xf32>
    %cst = arith.constant 5.000000e-01 : f32
    %15 = vector.broadcast %cst : f32 to vector<16x128xf32>
    %16 = arith.mulf %15, %12 : vector<16x128xf32>
    %17 = math.tanh %16 : vector<16x128xf32>
    %cst_7 = arith.constant 1.000000e+00 : f32
    %18 = vector.broadcast %cst_7 : f32 to vector<16x128xf32>
    %19 = arith.addf %17, %18 : vector<16x128xf32>
    %cst_8 = arith.constant 5.000000e-01 : f32
    %20 = vector.broadcast %cst_8 : f32 to vector<16x128xf32>
    %21 = arith.mulf %20, %19 : vector<16x128xf32>
    %22 = tpu.iota {dimensions = array<i32: 0>} : vector<16x128xi32>
    %23 = vector.broadcast %10 : i32 to vector<16x128xi32>
    %24 = arith.addi %22, %23 : vector<16x128xi32>
    %25 = vector.broadcast %6 : i32 to vector<16x128xi32>
    %26 = arith.cmpi slt, %24, %25 : vector<16x128xi32>
    %c0_9 = arith.constant 0 : index
    %c0_10 = arith.constant 0 : index
    %27 = vector.load %arg4[%c0_9, %c0_10] : memref<16x128xf32, #tpu.memory_space<vmem>>, vector<16x128xf32>
    %28 = arith.mulf %21, %14 : vector<16x128xf32>
    %cst_11 = arith.constant 0.000000e+00 : f32
    %29 = vector.broadcast %cst_11 : f32 to vector<16x128xf32>
    %30 = arith.select %26, %28, %29 : vector<16x128xi1>, vector<16x128xf32>
    %31 = arith.addf %27, %30 : vector<16x128xf32>
    %c0_12 = arith.constant 0 : index
    %c0_13 = arith.constant 0 : index
    %32 = vector.load %arg4[%c0_12, %c0_13] : memref<16x128xf32, #tpu.memory_space<vmem>>, vector<16x128xf32>
    tpu.vector_store %arg4[%c0_12, %c0_13], %31 {strides = array<i32>} : memref<16x128xf32, #tpu.memory_space<vmem>>, vector<16x128xf32>,
    %c1_i32_14 = arith.constant 1 : i32
    return
  }
  func.func @transform_0(%arg0: i32, %arg1: i32) -> (i32, i32) {
    %c1_i32 = arith.constant 1 : i32
    %0 = arith.muli %arg0, %c1_i32 : i32
    %1 = arith.addi %0, %arg1 : i32
    %c0_i32 = arith.constant 0 : i32
    %c0_i32_0 = arith.constant 0 : i32
    return %1, %c0_i32 : i32, i32
  }
  func.func @transform_1(%arg0: i32, %arg1: i32) -> (i32, i32) {
    %c1_i32 = arith.constant 1 : i32
    %0 = arith.muli %arg0, %c1_i32 : i32
    %1 = arith.addi %0, %arg1 : i32
    %c0_i32 = arith.constant 0 : i32
    %c0_i32_0 = arith.constant 0 : i32
    return %1, %c0_i32 : i32, i32
  }
  func.func @transform_2(%arg0: i32, %arg1: i32) -> (i32, i32) {
    %c0_i32 = arith.constant 0 : i32
    %c0_i32_0 = arith.constant 0 : i32
    return %arg0, %c0_i32 : i32, i32
  }
}

</mosaic_0001>

<llo_original>
// kernel: tpu_custom_call.1
$region0: #{tpu_custom_call.1}
  #allocation0 [shape = 'u32[]', space=smem, size = 0x4, offset = 0x4, fixed_abs, tag = 'smem constant byte address 0x4 - core index']
  #allocation1 [shape = 'u32[144,128]{1,0:T(1,128)}', space=vmem, size = 0x12000, scoped, tag = 'internal scratch']
  %s0 = inlined_call_operand.hbm [shape: f32[16,128], index: 0, kind: input, shape index: {}]
  %s1 = inlined_call_operand.hbm [shape: f32[16,128], index: 1, kind: input, shape index: {}]
  %s2 = inlined_call_operand.hbm [shape: f32[16,128], index: 2, kind: output, shape index: {}]
  %s3 = sld [smem:[#allocation0]]
  $region30: #{tpu_custom_call.1} parent=0
    _
  %s5 = ssub.s32 1, %s3
  %s6 = scalar_select 0, %s5, %s3
  $region1: #{tpu_custom_call.1} parent=0
    #allocation2 [shape = 'u8[8192]{0}', space=vmem, size = 0x2000, scoped, tag = 'input window, operand 0, single buffered']
    #allocation3 [shape = 's32[1]{0}', space=sflag, size = 0x4, scoped, tag = 'scoped memory for tpu_custom_call.1']
    #allocation4 [shape = 's32[1]{0}', space=sflag, size = 0x4, scoped, tag = 'scoped memory for tpu_custom_call.1']
    #allocation5 [shape = 'u8[8192]{0}', space=vmem, size = 0x2000, scoped, tag = 'input window, operand 1, single buffered']
    #allocation6 [shape = 's32[1]{0}', space=sflag, size = 0x4, scoped, tag = 'scoped memory for tpu_custom_call.1']
    #allocation7 [shape = 'u8[8192]{0}', space=vmem, size = 0x2000, scoped, tag = 'output window, operand 0, single buffered']
    %7 = vsyncpa [#allocation3], 0
    %8 = vsyncpa [#allocation6], 0
    %9 = vsyncpa [#allocation4], 0
    // Predicated region
    $region2: #{tpu_custom_call.1} parent=1 // pred_check
      _
    $region3: #{tpu_custom_call.1} parent=1 // pred_check_branch
      %11 = sbr.rel (0) target = $region5
    $region4: #{tpu_custom_call.1} parent=1 // pred_region
      %s12 = sadd.s32 0, 0
      %s13 = smul.u32 2, %s12
      %s15 = ssub.s32 256, 256
      %16 = vsyncadd [#allocation3], %s15
      %s17 = smul.addr %s13, 128
      %s18 = scalar_lea.hbm %s0, %s17
      %s19 = sshll.u32 [#allocation2], 4
      %s20 = int_to_ptr.vmem [resolvable:$true] %s19
      %25 = dma.hbm_to_vmem [thread:$0]  %s18, 256, %s20, [#allocation3], 128, 128, 8
    $region5: #{tpu_custom_call.1} parent=1 // pred_fallthru
      _
    // Predicated region
    $region6: #{tpu_custom_call.1} parent=1 // pred_check
      _
    $region7: #{tpu_custom_call.1} parent=1 // pred_check_branch
      %27 = sbr.rel (0) target = $region9
    $region8: #{tpu_custom_call.1} parent=1 // pred_region
      %s28 = sadd.s32 0, 0
      %s29 = smul.u32 2, %s28
      %s31 = ssub.s32 256, 256
      %32 = vsyncadd [#allocation6], %s31
      %s33 = smul.addr %s29, 128
      %s34 = scalar_lea.hbm %s1, %s33
      %s35 = sshll.u32 [#allocation5], 4
      %s36 = int_to_ptr.vmem [resolvable:$true] %s35
      %41 = dma.hbm_to_vmem [thread:$0]  %s34, 256, %s36, [#allocation6], 128, 128, 8
    $region9: #{tpu_custom_call.1} parent=1 // pred_fallthru
      _
    // Predicated region
    $region10: #{tpu_custom_call.1} parent=1 // pred_check
      _
    $region11: #{tpu_custom_call.1} parent=1 // pred_check_branch
      %43 = sbr.rel (0) target = $region13
    $region12: #{tpu_custom_call.1} parent=1 // pred_region
      %44 = dma.done [#allocation3], 256
    $region13: #{tpu_custom_call.1} parent=1 // pred_fallthru
      _
    // Predicated region
    $region14: #{tpu_custom_call.1} parent=1 // pred_check
      _
    $region15: #{tpu_custom_call.1} parent=1 // pred_check_branch
      %46 = sbr.rel (0) target = $region17
    $region16: #{tpu_custom_call.1} parent=1 // pred_region
      %47 = dma.done [#allocation6], 256
    $region17: #{tpu_custom_call.1} parent=1 // pred_fallthru
      _
    %s48 = sadd.s32 0, 0
    %s49 = smul.u32 2, %s48
    %s50 = sadd.s32 0, 0
    %s51 = smul.u32 2, %s50
    %p52 = scmp.eq.s32.totalorder 0, 0
    // Predicated region
    $region18: #{tpu_custom_call.1} parent=1 // pred_check
      %p53 = pneg %p52
    $region19: #{tpu_custom_call.1} parent=1 // pred_check_branch
      %55 = sbr.rel (%p53) target = $region21
    $region20: #{tpu_custom_call.1} parent=1 // pred_region
      %56 = vst [vmem:[#allocation7] sm:$0xff] 0.0
      %57 = vst [vmem:[#allocation7 + $0x8] sm:$0xff] 0.0
    $region21: #{tpu_custom_call.1} parent=1 // pred_fallthru
      _
    %s58 = sadd.s32 0, 0
    %s59 = smul.u32 %s58, 16
    %s60 = ssub.s32 16, %s59
    %v61 = vld [vmem:[#allocation2] sm:$0xff]
    %v62 = vld [vmem:[#allocation2 + $0x8] sm:$0xff]
    %v63 = vld [vmem:[#allocation5] sm:$0xff]
    %v64 = vld [vmem:[#allocation5 + $0x8] sm:$0xff]
    %v65 = vmul.f32 %v61, 0.5
    %v66 = vmul.f32 %v62, 0.5
    %v67 = vtanh.pop %v65
    %v68 = vtanh.pop %v66
    %v69 = vadd.f32 %v67, 1.0
    %v70 = vadd.f32 %v68, 1.0
    %v71 = vmul.f32 %v69, 0.5
    %v72 = vmul.f32 %v70, 0.5
    %v73 = vlaneseq
    %v74 = vshrl.u32 %v73, 7
    %v75 = vadd.s32 %v74, 8
    %v76 = vstv 0
    %v77 = vadd.s32 %v74, %v76
    %v78 = vadd.s32 %v75, %v76
    %v79 = vstv %s60
    %vm80 = vcmp.lt.s32.totalorder %v77, %v79
    %vm81 = vcmp.lt.s32.totalorder %v78, %v79
    %v82 = vld [vmem:[#allocation7] sm:$0xff]
    %v83 = vld [vmem:[#allocation7 + $0x8] sm:$0xff]
    %v84 = vmul.f32 %v71, %v63
    %v85 = vmul.f32 %v72, %v64
    %v86 = vsel %vm80, %v84, 0.0
    %v87 = vsel %vm81, %v85, 0.0
    %v88 = vadd.f32 %v82, %v86
    %v89 = vadd.f32 %v83, %v87
    %90 = vst [vmem:[#allocation7] sm:$0xff] %v88
    %91 = vst [vmem:[#allocation7 + $0x8] sm:$0xff] %v89
    // Predicated region
    $region22: #{tpu_custom_call.1} parent=1 // pred_check
      _
    $region23: #{tpu_custom_call.1} parent=1 // pred_check_branch
      %93 = sbr.rel (0) target = $region25
    $region24: #{tpu_custom_call.1} parent=1 // pred_region
      %s95 = ssub.s32 256, 256
      %96 = vsyncadd [#allocation4], %s95
      %s97 = sshll.u32 [#allocation7], 4
      %s98 = int_to_ptr.vmem [resolvable:$true] %s97
      %103 = dma.vmem_to_hbm [thread:$0]  %s98, 256, %s2, [#allocation4], 128, 128, 8
    $region25: #{tpu_custom_call.1} parent=1 // pred_fallthru
      _
    // Predicated region
    $region26: #{tpu_custom_call.1} parent=1 // pred_check
      _
    $region27: #{tpu_custom_call.1} parent=1 // pred_check_branch
      %105 = sbr.rel (0) target = $region29
    $region28: #{tpu_custom_call.1} parent=1 // pred_region
      %106 = dma.done [#allocation4], 256
    $region29: #{tpu_custom_call.1} parent=1 // pred_fallthru
      _
    %107 = vsyncpa [#allocation3], 1
    %108 = vsyncpa [#allocation6], 1
    %109 = vsyncpa [#allocation4], 1

</llo_original>
